<compile_context>
chip_gen: v7x
topology: tpu7x:2x2x1
jax: 0.10.0
libtpu: 0.0.40
codegen_flags: <defaults>
</compile_context>

<pallas_src>
import functools

import jax
import jax.numpy as jnp
from jax.experimental import pallas as pl
from jax.experimental.pallas import tpu as pltpu

IN_FEATURES = 32   # Flatten() output width expected by the encoder Linear
HIDDEN = 5
PACK = 4           # batch rows packed per 128-lane row (4 * 32 = 128)
LANES = PACK * IN_FEATURES          # 128
HID_PACKED = PACK * HIDDEN          # 20


def _round_up(x, m):
    return ((x + m - 1) // m) * m


def luxae_kernel(x_ref, w1_ref, w2_ref, out_ref):
    """Fused encoder/decoder forward on a lane-dense packed tile.

    x_ref  : [TILE, 128]  4 flattened batch rows per packed row (bf16)
    w1_ref : [128, 20]    block-diagonal kron(I4, W_enc.T)
    w2_ref : [20, 128]    block-diagonal kron(I4, W_dec.T)
    out_ref: [TILE, 128]  sigmoid output, packed the same way
    """
    x = x_ref[...]
    # encoder: Linear(32 -> 5, bias=False) + ReLU (applied per 32-wide block)
    h = jnp.dot(x, w1_ref[...], preferred_element_type=jnp.float32)
    h = jnp.maximum(h, 0.0).astype(w2_ref.dtype)
    # decoder: Linear(5 -> 32, bias=False) + Sigmoid
    y = jnp.dot(h, w2_ref[...], preferred_element_type=jnp.float32)
    out_ref[...] = jax.nn.sigmoid(y).astype(out_ref.dtype)


def prepare_params(w_enc, w_dec, dtype=jnp.bfloat16):
    """One-time weight prep (hoisted out of the per-call path).

    w_enc: [5, 32]  PyTorch nn.Linear weight (out x in) of encoder
    w_dec: [32, 5]  PyTorch nn.Linear weight (out x in) of decoder
    Returns block-diagonal (kron with I4) weights for the packed layout.
    """
    w1 = w_enc.T.astype(jnp.float32)                     # [32, 5]
    w2 = w_dec.T.astype(jnp.float32)                     # [5, 32]
    eye = jnp.eye(PACK, dtype=jnp.float32)
    w1_blk = jnp.kron(eye, w1).astype(dtype)             # [128, 20]
    w2_blk = jnp.kron(eye, w2).astype(dtype)             # [20, 128]
    return w1_blk, w2_blk


@functools.partial(jax.jit, static_argnames=("tile_rows",))
def luxae_forward(x, w1_blk, w2_blk, *, tile_rows=2048):
    """x: [B, ...] whose trailing dims flatten to 32 features.

    tile_rows: packed-row tile (each packed row = 4 batch rows); 2048 packed
    rows of bf16 -> 512 KiB per in/out tile, comfortably double-buffered
    within the default scoped VMEM on v5e/v6e/v7x.
    """
    io_dtype = w1_blk.dtype
    B = x.shape[0]
    x_flat = x.reshape(B, -1)
    assert x_flat.shape[1] == IN_FEATURES, "LuxAE expects 32 features after Flatten"
    x_flat = x_flat.astype(io_dtype)

    # Pack 4 batch rows per 128-lane row; pad batch so the packed-row count is
    # a whole number of (8-aligned) tiles.  Padded rows are sliced off at the end.
    rows = pl.cdiv(B, PACK)
    tile = min(int(tile_rows), _round_up(rows, 8))
    tile = _round_up(tile, 8)
    rows_padded = _round_up(rows, tile)
    b_padded = rows_padded * PACK
    if b_padded != B:
        x_flat = jnp.pad(x_flat, ((0, b_padded - B), (0, 0)))
    x_packed = x_flat.reshape(rows_padded, LANES)

    itemsize = jnp.dtype(io_dtype).itemsize
    cost = pl.CostEstimate(
        flops=2 * 2 * b_padded * IN_FEATURES * HIDDEN,            # two matmuls
        transcendentals=b_padded * IN_FEATURES,                   # sigmoid
        bytes_accessed=(2 * b_padded * IN_FEATURES * itemsize
                        + (w1_blk.size + w2_blk.size) * itemsize),
    )

    out_packed = pl.pallas_call(
        luxae_kernel,
        out_shape=jax.ShapeDtypeStruct((rows_padded, LANES), io_dtype),
        grid=(rows_padded // tile,),
        in_specs=[
            pl.BlockSpec((tile, LANES), lambda i: (i, 0)),
            pl.BlockSpec((LANES, HID_PACKED), lambda i: (0, 0)),   # fetched once
            pl.BlockSpec((HID_PACKED, LANES), lambda i: (0, 0)),   # fetched once
        ],
        out_specs=pl.BlockSpec((tile, LANES), lambda i: (i, 0)),
        compiler_params=pltpu.CompilerParams(
            dimension_semantics=("parallel",),
        ),
        cost_estimate=cost,
    )(x_packed, w1_blk, w2_blk)

    return out_packed.reshape(b_padded, IN_FEATURES)[:B]


def init_params(key):
    """PyTorch nn.Linear default init: U(-1/sqrt(fan_in), 1/sqrt(fan_in)), no bias."""
    k1, k2 = jax.random.split(key)
    bound_enc = 1.0 / jnp.sqrt(32.0)
    bound_dec = 1.0 / jnp.sqrt(5.0)
    w_enc = jax.random.uniform(k1, (5, 32), jnp.float32, -bound_enc, bound_enc)
    w_dec = jax.random.uniform(k2, (32, 5), jnp.float32, -bound_dec, bound_dec)
    return w_enc, w_dec


def _reference(x_flat, w_enc, w_dec, io_dtype=jnp.bfloat16):
    """Pure-JAX reference with the same bf16-rounded inputs/weights, f32 math."""
    xr = x_flat.astype(io_dtype).astype(jnp.float32)
    w1r = w_enc.astype(io_dtype).astype(jnp.float32)
    w2r = w_dec.astype(io_dtype).astype(jnp.float32)
    return jax.nn.sigmoid(jnp.maximum(xr @ w1r.T, 0.0) @ w2r.T)


if __name__ == "__main__":
    key = jax.random.PRNGKey(0)
    k_params, k_x1, k_x2 = jax.random.split(key, 3)

    w_enc, w_dec = init_params(k_params)
    w1_blk, w2_blk = prepare_params(w_enc, w_dec)          # one-time weight prep

    # Small input consistent with the module: batch=8, flattens to 32 features.
    x = jax.random.normal(k_x1, (8, 4, 8), jnp.float32)
    out = jax.block_until_ready(luxae_forward(x, w1_blk, w2_blk))
    assert out.shape == (8, 32)
    ref = _reference(x.reshape(8, -1), w_enc, w_dec)
    assert jnp.allclose(out.astype(jnp.float32), ref, atol=2e-2, rtol=0.0)

    # Exercise the tiled / padded path: batch not divisible by 4, grid > 1.
    x2 = jax.random.normal(k_x2, (70, 32), jnp.float32)
    out2 = jax.block_until_ready(luxae_forward(x2, w1_blk, w2_blk, tile_rows=8))
    assert out2.shape == (70, 32)
    ref2 = _reference(x2, w_enc, w_dec)
    assert jnp.allclose(out2.astype(jnp.float32), ref2, atol=2e-2, rtol=0.0)

    print("KERNEL_OK")
</pallas_src>

<mosaic_0001>
module attributes {stable_mosaic.version = 11 : i64} {
  func.func @luxae_kernel(%arg0: i32, %arg1: memref<8x128xbf16, #tpu.memory_space<vmem>>, %arg2: memref<128x20xbf16, #tpu.memory_space<vmem>>, %arg3: memref<20x128xbf16, #tpu.memory_space<vmem>>, %arg4: memref<8x128xbf16, #tpu.memory_space<vmem>>) attributes {dimension_semantics = [#tpu.dimension_semantics<parallel>], iteration_bounds = array<i64: 1>, scalar_prefetch = 0 : i64, scratch_operands = 0 : i64, tpu.core_type = #tpu.core_type<tc>, window_params = [{transform_indices = @transform_0, window_bounds = array<i64: 8, 128>}, {pipeline_mode = #tpu.pipeline_mode<synchronous>, transform_indices = @transform_1, window_bounds = array<i64: 128, 20>}, {pipeline_mode = #tpu.pipeline_mode<synchronous>, transform_indices = @transform_2, window_bounds = array<i64: 20, 128>}, {transform_indices = @transform_3, window_bounds = array<i64: 8, 128>}]} {
    %c0 = arith.constant 0 : index
    %c0_0 = arith.constant 0 : index
    %0 = vector.load %arg1[%c0, %c0_0] : memref<8x128xbf16, #tpu.memory_space<vmem>>, vector<8x128xbf16>
    %c0_1 = arith.constant 0 : index
    %c0_2 = arith.constant 0 : index
    %1 = vector.load %arg2[%c0_1, %c0_2] : memref<128x20xbf16, #tpu.memory_space<vmem>>, vector<128x20xbf16>
    %cst = arith.constant dense<0.000000e+00> : vector<8x20xf32>
    %2 = tpu.matmul %0, %1, %cst {dimension_numbers = #tpu.dot_dimension_numbers<[1], [0], [0], [1], [0, 0, 1, 1], [], []>} : vector<8x128xbf16>, vector<128x20xbf16>, vector<8x20xf32> -> vector<8x20xf32>
    %cst_3 = arith.constant 0.000000e+00 : f32
    %3 = vector.broadcast %cst_3 : f32 to vector<8x20xf32>
    %4 = arith.maximumf %2, %3 : vector<8x20xf32>
    %5 = arith.truncf %4 : vector<8x20xf32> to vector<8x20xbf16>
    %c0_4 = arith.constant 0 : index
    %c0_5 = arith.constant 0 : index
    %6 = vector.load %arg3[%c0_4, %c0_5] : memref<20x128xbf16, #tpu.memory_space<vmem>>, vector<20x128xbf16>
    %cst_6 = arith.constant dense<0.000000e+00> : vector<8x128xf32>
    %7 = tpu.matmul %5, %6, %cst_6 {dimension_numbers = #tpu.dot_dimension_numbers<[1], [0], [0], [1], [0, 0, 1, 1], [], []>} : vector<8x20xbf16>, vector<20x128xbf16>, vector<8x128xf32> -> vector<8x128xf32>
    %8 = arith.negf %7 : vector<8x128xf32>
    %9 = math.exp %8 : vector<8x128xf32>
    %cst_7 = arith.constant 1.000000e+00 : f32
    %10 = vector.broadcast %cst_7 : f32 to vector<8x128xf32>
    %11 = arith.addf %10, %9 : vector<8x128xf32>
    %12 = arith.divf %10, %11 : vector<8x128xf32>
    %13 = arith.truncf %12 : vector<8x128xf32> to vector<8x128xbf16>
    %c0_8 = arith.constant 0 : index
    %c0_9 = arith.constant 0 : index
    %14 = vector.load %arg4[%c0_8, %c0_9] : memref<8x128xbf16, #tpu.memory_space<vmem>>, vector<8x128xbf16>
    tpu.vector_store %arg4[%c0_8, %c0_9], %13 {strides = array<i32>} : memref<8x128xbf16, #tpu.memory_space<vmem>>, vector<8x128xbf16>,
    return
  }
  func.func @transform_0(%arg0: i32) -> (i32, i32) {
    %c0_i32 = arith.constant 0 : i32
    %c0_i32_0 = arith.constant 0 : i32
    return %arg0, %c0_i32 : i32, i32
  }
  func.func @transform_1(%arg0: i32) -> (i32, i32) {
    %c0_i32 = arith.constant 0 : i32
    %c0_i32_0 = arith.constant 0 : i32
    %c0_i32_1 = arith.constant 0 : i32
    return %c0_i32, %c0_i32_0 : i32, i32
  }
  func.func @transform_2(%arg0: i32) -> (i32, i32) {
    %c0_i32 = arith.constant 0 : i32
    %c0_i32_0 = arith.constant 0 : i32
    %c0_i32_1 = arith.constant 0 : i32
    return %c0_i32, %c0_i32_0 : i32, i32
  }
  func.func @transform_3(%arg0: i32) -> (i32, i32) {
    %c0_i32 = arith.constant 0 : i32
    %c0_i32_0 = arith.constant 0 : i32
    return %arg0, %c0_i32 : i32, i32
  }
}

</mosaic_0001>

<llo_original>
// kernel: luxae_forward.1
$region0: #{luxae_forward.1}
  #allocation0 [shape = 'u32[]', space=smem, size = 0x4, offset = 0x4, fixed_abs, tag = 'smem constant byte address 0x4 - core index']
  #allocation1 [shape = 'u32[144,128]{1,0:T(1,128)}', space=vmem, size = 0x12000, scoped, tag = 'internal scratch']
  %s0 = inlined_call_operand.vmem [shape: bf16[8,128], index: 0, kind: input, shape index: {}]
  %s1 = inlined_call_operand.vmem [shape: bf16[128,20], index: 1, kind: input, shape index: {}]
  %s2 = inlined_call_operand.vmem [shape: bf16[20,128], index: 2, kind: input, shape index: {}]
  %s3 = inlined_call_operand.vmem [shape: bf16[8,128], index: 3, kind: output, shape index: {}]
  %s4 = sld [smem:[#allocation0]]
  $region22: #{luxae_forward.1} parent=0
    _
  %s6 = ssub.s32 1, %s4
  %s7 = scalar_select 0, %s6, %s4
  // Predicated region
  $region2: #{luxae_forward.1} parent=0 // pred_check
    _
  $region3: #{luxae_forward.1} parent=0 // pred_check_branch
    %9 = sbr.rel (0) target = $region5
  $region4: #{luxae_forward.1} parent=0 // pred_region
    _
  $region5: #{luxae_forward.1} parent=0 // pred_fallthru
    _
  // Predicated region
  $region6: #{luxae_forward.1} parent=0 // pred_check
    _
  $region7: #{luxae_forward.1} parent=0 // pred_check_branch
    %11 = sbr.rel (0) target = $region9
  $region8: #{luxae_forward.1} parent=0 // pred_region
    _
  $region9: #{luxae_forward.1} parent=0 // pred_fallthru
    _
  // Predicated region
  $region10: #{luxae_forward.1} parent=0 // pred_check
    _
  $region11: #{luxae_forward.1} parent=0 // pred_check_branch
    %13 = sbr.rel (0) target = $region13
  $region12: #{luxae_forward.1} parent=0 // pred_region
    _
  $region13: #{luxae_forward.1} parent=0 // pred_fallthru
    _
  %v15 = vld [vmem:[%s0] sm:$0xf]
  %v16 = vld [vmem:[%s1] sm:$0xf]
  %v17 = vld [vmem:[%s1 + $0x4] sm:$0xf]
  %v18 = vld [vmem:[%s1 + $0x8] sm:$0xf]
  %v19 = vld [vmem:[%s1 + $0xc] sm:$0xf]
  %v20 = vld [vmem:[%s1 + $0x10] sm:$0xf]
  %v21 = vld [vmem:[%s1 + $0x14] sm:$0xf]
  %v22 = vld [vmem:[%s1 + $0x18] sm:$0xf]
  %v23 = vld [vmem:[%s1 + $0x1c] sm:$0xf]
  %v24 = vld [vmem:[%s1 + $0x20] sm:$0xf]
  %v25 = vld [vmem:[%s1 + $0x24] sm:$0xf]
  %v26 = vld [vmem:[%s1 + $0x28] sm:$0xf]
  %v27 = vld [vmem:[%s1 + $0x2c] sm:$0xf]
  %v28 = vld [vmem:[%s1 + $0x30] sm:$0xf]
  %v29 = vld [vmem:[%s1 + $0x34] sm:$0xf]
  %v30 = vld [vmem:[%s1 + $0x38] sm:$0xf]
  %v31 = vld [vmem:[%s1 + $0x3c] sm:$0xf]
  %v48 = vunpack.c.l.b16 %v16
  %v49 = vunpack.c.l.b16 %v17
  %v50 = vunpack.c.l.b16 %v18
  %v51 = vunpack.c.l.b16 %v19
  %v52 = vunpack.c.l.b16 %v20
  %v53 = vunpack.c.l.b16 %v21
  %v54 = vunpack.c.l.b16 %v22
  %v55 = vunpack.c.l.b16 %v23
  %v56 = vunpack.c.l.b16 %v24
  %v57 = vunpack.c.l.b16 %v25
  %v58 = vunpack.c.l.b16 %v26
  %v59 = vunpack.c.l.b16 %v27
  %v60 = vunpack.c.l.b16 %v28
  %v61 = vunpack.c.l.b16 %v29
  %v62 = vunpack.c.l.b16 %v30
  %v63 = vunpack.c.l.b16 %v31
  %v64 = vpack.c.b16 %v49, %v48
  %v65 = vpack.c.b16 %v51, %v50
  %v66 = vpack.c.b16 %v53, %v52
  %v67 = vpack.c.b16 %v55, %v54
  %v68 = vpack.c.b16 %v57, %v56
  %v69 = vpack.c.b16 %v59, %v58
  %v70 = vpack.c.b16 %v61, %v60
  %v71 = vpack.c.b16 %v63, %v62
  %80 = vmatprep.subr.bf16.mxu0 0
  %81 = vmatpush1.bf16.msra.mxu0 %v64
  %82 = vmatprep.subr.bf16.mxu0 0
  %83 = vmatpush1.bf16.msra.mxu0 %v65
  %84 = vmatprep.subr.bf16.mxu0 0
  %85 = vmatpush1.bf16.msra.mxu0 %v66
  %86 = vmatprep.subr.bf16.mxu0 0
  %87 = vmatpush1.bf16.msra.mxu0 %v67
  %88 = vmatprep.subr.bf16.mxu0 0
  %89 = vmatpush1.bf16.msra.mxu0 %v68
  %90 = vmatprep.subr.bf16.mxu0 0
  %91 = vmatpush1.bf16.msra.mxu0 %v69
  %92 = vmatprep.subr.bf16.mxu0 0
  %93 = vmatpush1.bf16.msra.mxu0 %v70
  %94 = vmatprep.subr.bf16.mxu0 0
  %95 = vmatpush1.bf16.msra.mxu0 %v71
  %96 = vmatprep.subr.bf16.mxu0 0
  %97 = vmatpush1.bf16.msra.mxu0 0
  %98 = vmatprep.subr.bf16.mxu0 0
  %99 = vmatpush1.bf16.msra.mxu0 0
  %100 = vmatprep.subr.bf16.mxu0 0
  %101 = vmatpush1.bf16.msra.mxu0 0
  %102 = vmatprep.subr.bf16.mxu0 0
  %103 = vmatpush1.bf16.msra.mxu0 0
  %104 = vmatprep.subr.bf16.mxu0 0
  %105 = vmatpush1.bf16.msra.mxu0 0
  %106 = vmatprep.subr.bf16.mxu0 0
  %107 = vmatpush1.bf16.msra.mxu0 0
  %108 = vmatprep.subr.bf16.mxu0 0
  %109 = vmatpush1.bf16.msra.mxu0 0
  %110 = vmatprep.subr.bf16.mxu0 0
  %111 = vmatpush1.bf16.msra.mxu0 0
  %112 = vmatprep.mubr.bf16.mxu0 0
  %113 = vmatmul.mubr.bf16.gmra.mrb[0].mxu0 %v15
  %v114 = vpop.f32.mrb[0].mxu0
  %v115 = vadd.f32 0.0, %v114
  %v116 = vpop.f32.mrb[0].mxu0
  %v117 = vpop.f32.mrb[0].mxu0
  %v118 = vpop.f32.mrb[0].mxu0
  %119 = vdwg.mxu0
  %v120 = vmax.f32 %v115, 0.0
  %v121 = vpack.c.bf16 %v120, %v120
  %v122 = vld [vmem:[%s2] sm:$0xf]
  %v123 = vld [vmem:[%s2 + $0x4] sm:$0xf]
  %v124 = vld [vmem:[%s2 + $0x8] sm:$0x3]
  %v128 = vunpack.c.l.b16 %v122
  %v129 = vunpack.c.l.b16 %v123
  %v130 = vunpack.c.l.b16 %v124
  %v131 = vpack.c.b16 %v129, %v128
  %v132 = vpack.c.b16 %v130, %v130
  %vm134 = vcmask 162816
  %v136 = vsel %vm134, %v121, 0
  %vm138 = vcmask 1041408
  %v140 = vsel %vm138, %v132, 0
  %142 = vmatprep.subr.bf16.mxu0 0
  %143 = vmatpush1.bf16.msra.mxu0 %v131
  %144 = vmatprep.subr.bf16.mxu0 0
  %145 = vmatpush1.bf16.msra.mxu0 %v140
  %146 = vmatprep.subr.bf16.mxu0 0
  %147 = vmatpush1.bf16.msra.mxu0 0
  %148 = vmatprep.subr.bf16.mxu0 0
  %149 = vmatpush1.bf16.msra.mxu0 0
  %150 = vmatprep.subr.bf16.mxu0 0
  %151 = vmatpush1.bf16.msra.mxu0 0
  %152 = vmatprep.subr.bf16.mxu0 0
  %153 = vmatpush1.bf16.msra.mxu0 0
  %154 = vmatprep.subr.bf16.mxu0 0
  %155 = vmatpush1.bf16.msra.mxu0 0
  %156 = vmatprep.subr.bf16.mxu0 0
  %157 = vmatpush1.bf16.msra.mxu0 0
  %158 = vmatprep.subr.bf16.mxu0 0
  %159 = vmatpush1.bf16.msra.mxu0 0
  %160 = vmatprep.subr.bf16.mxu0 0
  %161 = vmatpush1.bf16.msra.mxu0 0
  %162 = vmatprep.subr.bf16.mxu0 0
  %163 = vmatpush1.bf16.msra.mxu0 0
  %164 = vmatprep.subr.bf16.mxu0 0
  %165 = vmatpush1.bf16.msra.mxu0 0
  %166 = vmatprep.subr.bf16.mxu0 0
  %167 = vmatpush1.bf16.msra.mxu0 0
  %168 = vmatprep.subr.bf16.mxu0 0
  %169 = vmatpush1.bf16.msra.mxu0 0
  %170 = vmatprep.subr.bf16.mxu0 0
  %171 = vmatpush1.bf16.msra.mxu0 0
  %172 = vmatprep.subr.bf16.mxu0 0
  %173 = vmatpush1.bf16.msra.mxu0 0
  %174 = vmatprep.mubr.bf16.mxu0 0
  %175 = vmatmul.mubr.bf16.gmra.mrb[0].mxu0 %v136
  %v176 = vpop.f32.mrb[0].mxu0
  %v177 = vadd.f32 0.0, %v176
  %v178 = vpop.f32.mrb[0].mxu0
  %v179 = vpop.f32.mrb[0].mxu0
  %v180 = vpop.f32.mrb[0].mxu0
  %181 = vdwg.mxu0
  %v182 = vxor.u32 %v177, 2147483648
  %v183 = vmul.f32 %v182, 1.442695
  %v184 = vpow.pop %v183
  %v185 = vadd.f32 %v184, 1.0
  %v186 = vrcp.pop %v185
  %v187 = vmul.f32 1.0, %v186
  %v188 = vpack.c.bf16 %v187, %v187
  %189 = vst [vmem:[%s3] sm:$0xf] %v188
  // Predicated region
  $region14: #{luxae_forward.1} parent=0 // pred_check
    _
  $region15: #{luxae_forward.1} parent=0 // pred_check_branch
    %191 = sbr.rel (0) target = $region17
  $region16: #{luxae_forward.1} parent=0 // pred_region
    _
  $region17: #{luxae_forward.1} parent=0 // pred_fallthru
    _
  // Predicated region
  $region18: #{luxae_forward.1} parent=0 // pred_check
    _
  $region19: #{luxae_forward.1} parent=0 // pred_check_branch
    %193 = sbr.rel (0) target = $region21
  $region20: #{luxae_forward.1} parent=0 // pred_region
    _
  $region21: #{luxae_forward.1} parent=0 // pred_fallthru
    _

</llo_original>
